<compile_context>
chip_gen: v7x
topology: tpu7x:2x2x1
jax: 0.10.0
libtpu: 0.0.40
codegen_flags: <defaults>
</compile_context>

<pallas_src>
import jax
import jax.numpy as jnp
from jax.experimental import pallas as pl
from jax.experimental.pallas import tpu as pltpu


def _round_up(v, k):
    return (v + k - 1) // k * k


# ---------------------------------------------------------------------------
# Kernels
# ---------------------------------------------------------------------------
def _linear_kernel_single_k(x_ref, wt_ref, b_ref, o_ref):
    # x_ref: [TM, K], wt_ref: [K, TN], b_ref: [1, TN], o_ref: [TM, TN]
    acc = jnp.dot(x_ref[...], wt_ref[...], preferred_element_type=jnp.float32)
    o_ref[...] = (acc + b_ref[...].astype(jnp.float32)).astype(o_ref.dtype)


def _linear_kernel_k_tiled(x_ref, wt_ref, b_ref, o_ref, acc_ref):
    # x_ref: [TM, TK], wt_ref: [TK, TN], b_ref: [1, TN], o_ref/acc_ref: [TM, TN]
    k = pl.program_id(2)

    @pl.when(k == 0)
    def _():
        acc_ref[...] = jnp.zeros_like(acc_ref)

    acc_ref[...] += jnp.dot(x_ref[...], wt_ref[...],
                            preferred_element_type=jnp.float32)

    @pl.when(k == pl.num_programs(2) - 1)
    def _():
        o_ref[...] = (acc_ref[...]
                      + b_ref[...].astype(jnp.float32)).astype(o_ref.dtype)


# ---------------------------------------------------------------------------
# Weight prep (hoisted out of the per-forward hot path)
# ---------------------------------------------------------------------------
def prepare_weight(weight, W0, compute_dtype=None):
    """Fold centering + W0 into the effective weight, stored [m, n].

    Call once per parameter update (not per forward): avoids redoing the
    centering/reshape/+W0 and a full HBM transpose pass on every call.

    weight: [n, g, m//g], W0: [n, m]  ->  returns W_eff^T with shape [m, n].
    """
    n, g, mg = weight.shape
    W = weight - jnp.mean(weight, axis=2, keepdims=True)   # center per group
    W = W.reshape(n, g * mg) + W0                           # [n, m]
    Wt = W.T                                                # [m, n] (once)
    if compute_dtype is not None:
        Wt = Wt.astype(compute_dtype)
    return Wt


# ---------------------------------------------------------------------------
# Forward
# ---------------------------------------------------------------------------
def equivariant_linear_apply(x, Wt, bias, *, tm=512, tk=None,
                             compute_dtype=None):
    """y = x @ Wt + bias with Wt = prepare_weight(...)  (shape [m, n]).

    x: [..., m].  compute_dtype (e.g. jnp.bfloat16) casts the MXU inputs;
    accumulation and the epilogue stay f32, output keeps x.dtype.
    tk: optional K tile size (multiple of 128); by default K is tiled only
    when in_features > 1024.
    """
    m, n = Wt.shape
    out_dtype = x.dtype
    lead = x.shape[:-1]
    x2 = x.reshape(-1, m)
    M_rows = x2.shape[0]

    # --- tile / padding choices (layout & MXU friendly) --------------------
    N_pad = _round_up(n, 128)                   # lane-dense output stores
    if N_pad % 512 == 0:
        TN = 512
    elif N_pad % 256 == 0:
        TN = 256
    else:
        TN = 128
    TM = min(tm, _round_up(M_rows, 8))          # row tile, multiple of 8
    M_pad = _round_up(M_rows, TM)

    # K-axis tiling: engage only when K is large (or forced via tk=).
    if tk is None:
        use_k_tiles = m > 1024
        TK = 512 if use_k_tiles else m
    else:
        use_k_tiles = True
        TK = _round_up(int(tk), 128)
    K_pad = _round_up(m, TK) if use_k_tiles else m

    if compute_dtype is not None:
        if x2.dtype != compute_dtype:
            x2 = x2.astype(compute_dtype)
        if Wt.dtype != compute_dtype:
            Wt = Wt.astype(compute_dtype)
    if M_pad != M_rows or K_pad != m:
        x2 = jnp.pad(x2, ((0, M_pad - M_rows), (0, K_pad - m)))
    if N_pad != n or K_pad != m:
        Wt = jnp.pad(Wt, ((0, K_pad - m), (0, N_pad - n)))
    b1 = bias if bias is not None else jnp.zeros((n,), jnp.float32)
    b2 = jnp.pad(b1.astype(jnp.float32), (0, N_pad - n)).reshape(1, N_pad)

    cost = pl.CostEstimate(
        flops=2 * M_pad * K_pad * N_pad,
        transcendentals=0,
        bytes_accessed=(x2.size * x2.dtype.itemsize
                        + Wt.size * Wt.dtype.itemsize
                        + b2.size * 4
                        + M_pad * N_pad * jnp.dtype(out_dtype).itemsize),
    )

    if not use_k_tiles:
        grid = (M_pad // TM, N_pad // TN)
        grid_spec = pltpu.PrefetchScalarGridSpec(
            num_scalar_prefetch=0,
            grid=grid,
            in_specs=[
                # x: streamed over rows, replicated across the N axis.
                pl.BlockSpec((TM, K_pad), lambda i, j: (i, 0)),
                # weight / bias: replicated across the M axis.
                pl.BlockSpec((K_pad, TN), lambda i, j: (0, j)),
                pl.BlockSpec((1, TN), lambda i, j: (0, j)),
            ],
            out_specs=pl.BlockSpec((TM, TN), lambda i, j: (i, j)),
        )
        kernel = _linear_kernel_single_k
        dim_sem = ("parallel", "parallel")
    else:
        grid = (M_pad // TM, N_pad // TN, K_pad // TK)
        grid_spec = pltpu.PrefetchScalarGridSpec(
            num_scalar_prefetch=0,
            grid=grid,
            in_specs=[
                pl.BlockSpec((TM, TK), lambda i, j, k: (i, k)),
                pl.BlockSpec((TK, TN), lambda i, j, k: (k, j)),
                pl.BlockSpec((1, TN), lambda i, j, k: (0, j)),
            ],
            out_specs=pl.BlockSpec((TM, TN), lambda i, j, k: (i, j)),
            scratch_shapes=[pltpu.VMEM((TM, TN), jnp.float32)],
        )
        kernel = _linear_kernel_k_tiled
        dim_sem = ("parallel", "parallel", "arbitrary")

    out = pl.pallas_call(
        kernel,
        out_shape=jax.ShapeDtypeStruct((M_pad, N_pad), out_dtype),
        grid_spec=grid_spec,
        compiler_params=pltpu.CompilerParams(
            # Independent M/N axes -> shard across 2 TensorCores on v7x;
            # harmless no-op on single-TC v5e/v6e.  Tiles stay well within the
            # default scoped VMEM limit on all generations.
            dimension_semantics=dim_sem,
        ),
        cost_estimate=cost,
    )(x2, Wt, b2)

    out = out[:M_rows, :n]
    return out.reshape(*lead, n)


def equivariant_linear(x, weight, W0, bias, **kwargs):
    """Convenience one-shot forward matching EquivariantLinear.forward."""
    Wt = prepare_weight(weight, W0, compute_dtype=kwargs.get("compute_dtype"))
    return equivariant_linear_apply(x, Wt, bias, **kwargs)


def init_params(key, in_features, out_features, groups, dtype=jnp.float32):
    m, n, g = in_features, out_features, groups
    assert m % g == 0 and n % g == 0
    a = (g * jnp.arange(m)) // m
    b = (g * jnp.arange(n)) // n
    W0 = (a[None, :] == b[:, None]).astype(dtype) * (g / m)        # [n, m]
    bias = jnp.zeros((n,), dtype)                                   # like torch
    # xavier_uniform_ on tensor [n, g, m//g]: fan_in = g*(m//g), fan_out = n*(m//g)
    fan_in = g * (m // g)
    fan_out = n * (m // g)
    bound = (6.0 / (fan_in + fan_out)) ** 0.5
    weight = jax.random.uniform(key, (n, g, m // g), dtype,
                                minval=-bound, maxval=bound)
    return weight, W0, bias


def _reference(x, weight, W0, bias):
    n = W0.shape[0]
    W = weight - jnp.mean(weight, axis=2, keepdims=True)
    W = W.reshape(n, -1) + W0
    y = jnp.einsum("...m,nm->...n", x, W)
    if bias is not None:
        y = y + bias
    return y


if __name__ == "__main__":
    key = jax.random.PRNGKey(0)

    # ---------------- case 1: small, single-K-block path --------------------
    in_features, out_features, groups = 32, 64, 4
    batch, seq = 2, 8
    kw, kx, kw2, kx2 = jax.random.split(key, 4)
    weight, W0, bias = init_params(kw, in_features, out_features, groups)
    x = jax.random.normal(kx, (batch, seq, in_features), jnp.float32)
    y_ref = _reference(x, weight, W0, bias)

    # f32 MXU-input path (near bit-exact vs. reference).
    Wt_f32 = prepare_weight(weight, W0)                 # hoisted weight prep
    y32 = jax.block_until_ready(equivariant_linear_apply(x, Wt_f32, bias))
    assert y32.shape == (batch, seq, out_features)
    assert jnp.allclose(y32, y_ref, atol=1e-5, rtol=1e-5)

    # bf16 MXU-input path (perf mode); accumulation stays f32.
    Wt_bf16 = prepare_weight(weight, W0, compute_dtype=jnp.bfloat16)
    y16 = jax.block_until_ready(
        equivariant_linear_apply(x, Wt_bf16, bias, compute_dtype=jnp.bfloat16))
    assert y16.shape == (batch, seq, out_features)
    assert jnp.allclose(y16, y_ref, atol=5e-2, rtol=5e-2)

    # ---------------- case 2: force the K-tiled accumulator path ------------
    in_f2, out_f2, g2 = 320, 256, 4
    weight2, W02, bias2 = init_params(kw2, in_f2, out_f2, g2)
    x2 = jax.random.normal(kx2, (batch, seq, in_f2), jnp.float32)
    y_ref2 = _reference(x2, weight2, W02, bias2)

    Wt2 = prepare_weight(weight2, W02)
    y2 = jax.block_until_ready(
        equivariant_linear_apply(x2, Wt2, bias2, tk=128))   # 3 K-steps
    assert y2.shape == (batch, seq, out_f2)
    assert jnp.allclose(y2, y_ref2, atol=1e-4, rtol=1e-4)

    # bias=None path
    y2n = jax.block_until_ready(
        equivariant_linear_apply(x2, Wt2, None, tk=128))
    assert jnp.allclose(y2n, y_ref2 - bias2, atol=1e-4, rtol=1e-4)

    print("KERNEL_OK")
</pallas_src>

<mosaic_0001>
module attributes {stable_mosaic.version = 11 : i64} {
  func.func @_linear_kernel_single_k(%arg0: i32, %arg1: i32, %arg2: memref<16x32xf32, #tpu.memory_space<vmem>>, %arg3: memref<32x128xf32, #tpu.memory_space<vmem>>, %arg4: memref<1x128xf32, #tpu.memory_space<vmem>>, %arg5: memref<16x128xf32, #tpu.memory_space<vmem>>) attributes {dimension_semantics = [#tpu.dimension_semantics<parallel>, #tpu.dimension_semantics<parallel>], iteration_bounds = array<i64: 1, 1>, scalar_prefetch = 0 : i64, scratch_operands = 0 : i64, tpu.core_type = #tpu.core_type<tc>, window_params = [{transform_indices = @transform_0, window_bounds = array<i64: 16, 32>}, {transform_indices = @transform_1, window_bounds = array<i64: 32, 128>}, {transform_indices = @transform_2, window_bounds = array<i64: 1, 128>}, {transform_indices = @transform_3, window_bounds = array<i64: 16, 128>}]} {
    %c0 = arith.constant 0 : index
    %c0_0 = arith.constant 0 : index
    %0 = vector.load %arg2[%c0, %c0_0] : memref<16x32xf32, #tpu.memory_space<vmem>>, vector<16x32xf32>
    %c0_1 = arith.constant 0 : index
    %c0_2 = arith.constant 0 : index
    %1 = vector.load %arg3[%c0_1, %c0_2] : memref<32x128xf32, #tpu.memory_space<vmem>>, vector<32x128xf32>
    %cst = arith.constant dense<0.000000e+00> : vector<16x128xf32>
    %2 = tpu.matmul %0, %1, %cst {dimension_numbers = #tpu.dot_dimension_numbers<[1], [0], [0], [1], [0, 0, 1, 1], [], []>} : vector<16x32xf32>, vector<32x128xf32>, vector<16x128xf32> -> vector<16x128xf32>
    %c0_3 = arith.constant 0 : index
    %c0_4 = arith.constant 0 : index
    %3 = vector.load %arg4[%c0_3, %c0_4] : memref<1x128xf32, #tpu.memory_space<vmem>>, vector<1x128xf32>
    %4 = vector.broadcast %3 : vector<1x128xf32> to vector<16x128xf32>
    %5 = arith.addf %2, %4 : vector<16x128xf32>
    %c0_5 = arith.constant 0 : index
    %c0_6 = arith.constant 0 : index
    %6 = vector.load %arg5[%c0_5, %c0_6] : memref<16x128xf32, #tpu.memory_space<vmem>>, vector<16x128xf32>
    tpu.vector_store %arg5[%c0_5, %c0_6], %5 {strides = array<i32>} : memref<16x128xf32, #tpu.memory_space<vmem>>, vector<16x128xf32>,
    return
  }
  func.func @transform_0(%arg0: i32, %arg1: i32) -> (i32, i32) {
    %c0_i32 = arith.constant 0 : i32
    %c0_i32_0 = arith.constant 0 : i32
    return %arg0, %c0_i32 : i32, i32
  }
  func.func @transform_1(%arg0: i32, %arg1: i32) -> (i32, i32) {
    %c0_i32 = arith.constant 0 : i32
    %c0_i32_0 = arith.constant 0 : i32
    return %c0_i32, %arg1 : i32, i32
  }
  func.func @transform_2(%arg0: i32, %arg1: i32) -> (i32, i32) {
    %c0_i32 = arith.constant 0 : i32
    %c0_i32_0 = arith.constant 0 : i32
    return %c0_i32, %arg1 : i32, i32
  }
  func.func @transform_3(%arg0: i32, %arg1: i32) -> (i32, i32) {
    %c0_i32 = arith.constant 0 : i32
    return %arg0, %arg1 : i32, i32
  }
}

</mosaic_0001>

<llo_original>
// kernel: tpu_custom_call.1
$region0: #{tpu_custom_call.1}
  #allocation0 [shape = 'u32[]', space=smem, size = 0x4, offset = 0x4, fixed_abs, tag = 'smem constant byte address 0x4 - core index']
  #allocation1 [shape = 'u32[144,128]{1,0:T(1,128)}', space=vmem, size = 0x12000, scoped, tag = 'internal scratch']
  %s0 = inlined_call_operand.hbm [shape: f32[16,32], index: 0, kind: input, shape index: {}]
  %s1 = inlined_call_operand.hbm [shape: f32[32,128], index: 1, kind: input, shape index: {}]
  %s2 = inlined_call_operand.vmem [shape: f32[1,128], index: 2, kind: input, shape index: {}]
  %s3 = inlined_call_operand.hbm [shape: f32[16,128], index: 3, kind: output, shape index: {}]
  %s4 = sld [smem:[#allocation0]]
  $region30: #{tpu_custom_call.1} parent=0
    _
  %s6 = ssub.s32 1, %s4
  %s7 = scalar_select 0, %s6, %s4
  $region1: #{tpu_custom_call.1} parent=0
    #allocation2 [shape = 'u8[8192]{0}', space=vmem, size = 0x2000, scoped, tag = 'input window, operand 0, single buffered']
    #allocation3 [shape = 's32[1]{0}', space=sflag, size = 0x4, scoped, tag = 'scoped memory for tpu_custom_call.1']
    #allocation4 [shape = 's32[1]{0}', space=sflag, size = 0x4, scoped, tag = 'scoped memory for tpu_custom_call.1']
    #allocation5 [shape = 'u8[16384]{0}', space=vmem, size = 0x4000, scoped, tag = 'input window, operand 1, single buffered']
    #allocation6 [shape = 's32[1]{0}', space=sflag, size = 0x4, scoped, tag = 'scoped memory for tpu_custom_call.1']
    #allocation7 [shape = 'u8[8192]{0}', space=vmem, size = 0x2000, scoped, tag = 'output window, operand 0, single buffered']
    %8 = vsyncpa [#allocation3], 0
    %9 = vsyncpa [#allocation6], 0
    %10 = vsyncpa [#allocation4], 0
    // Predicated region
    $region2: #{tpu_custom_call.1} parent=1 // pred_check
      _
    $region3: #{tpu_custom_call.1} parent=1 // pred_check_branch
      %12 = sbr.rel (0) target = $region5
    $region4: #{tpu_custom_call.1} parent=1 // pred_region
      %s14 = ssub.s32 256, 256
      %15 = vsyncadd [#allocation3], %s14
      %s16 = sshll.u32 [#allocation2], 4
      %s17 = int_to_ptr.vmem [resolvable:$true] %s16
      %22 = dma.hbm_to_vmem [thread:$0]  %s0, 256, %s17, [#allocation3], 128, 128, 8
    $region5: #{tpu_custom_call.1} parent=1 // pred_fallthru
      _
    // Predicated region
    $region6: #{tpu_custom_call.1} parent=1 // pred_check
      _
    $region7: #{tpu_custom_call.1} parent=1 // pred_check_branch
      %24 = sbr.rel (0) target = $region9
    $region8: #{tpu_custom_call.1} parent=1 // pred_region
      %s26 = ssub.s32 512, 512
      %27 = vsyncadd [#allocation6], %s26
      %s28 = sshll.u32 [#allocation5], 4
      %s29 = int_to_ptr.vmem [resolvable:$true] %s28
      %34 = dma.hbm_to_vmem [thread:$0]  %s1, 512, %s29, [#allocation6], 128, 128, 8
    $region9: #{tpu_custom_call.1} parent=1 // pred_fallthru
      _
    // Predicated region
    $region10: #{tpu_custom_call.1} parent=1 // pred_check
      _
    $region11: #{tpu_custom_call.1} parent=1 // pred_check_branch
      %36 = sbr.rel (0) target = $region13
    $region12: #{tpu_custom_call.1} parent=1 // pred_region
      _
    $region13: #{tpu_custom_call.1} parent=1 // pred_fallthru
      _
    // Predicated region
    $region14: #{tpu_custom_call.1} parent=1 // pred_check
      _
    $region15: #{tpu_custom_call.1} parent=1 // pred_check_branch
      %38 = sbr.rel (0) target = $region17
    $region16: #{tpu_custom_call.1} parent=1 // pred_region
      %39 = dma.done [#allocation3], 256
    $region17: #{tpu_custom_call.1} parent=1 // pred_fallthru
      _
    // Predicated region
    $region18: #{tpu_custom_call.1} parent=1 // pred_check
      _
    $region19: #{tpu_custom_call.1} parent=1 // pred_check_branch
      %41 = sbr.rel (0) target = $region21
    $region20: #{tpu_custom_call.1} parent=1 // pred_region
      %42 = dma.done [#allocation6], 512
    $region21: #{tpu_custom_call.1} parent=1 // pred_fallthru
      _
    %v43 = vld [vmem:[#allocation2] sm:$0xff]
    %v44 = vld [vmem:[#allocation2 + $0x8] sm:$0xff]
    %v45 = vld [vmem:[#allocation5] sm:$0xff]
    %v46 = vld [vmem:[#allocation5 + $0x8] sm:$0xff]
    %v47 = vld [vmem:[#allocation5 + $0x10] sm:$0xff]
    %v48 = vld [vmem:[#allocation5 + $0x18] sm:$0xff]
    %v49 = vld [vmem:[%s2] sm:$0x1]
    %v51 = vlaneseq
    %v52 = vshrl.u32 %v51, 7
    %v53 = vsub.s32 0, %v52
    %v54 = vrot.slane %v49, %v53
    %vm56 = vcmask 261120
    %v58 = vsel %vm56, %v43, 0
    %v61 = vsel %vm56, %v44, 0
    %63 = vmatprep.subr.mxu0 0.0
    %64 = vmatpush1.msra.mxu0 %v45
    %65 = vmatprep.subr.mxu0 0.0
    %66 = vmatpush1.msra.mxu0 %v46
    %67 = vmatprep.subr.mxu0 0.0
    %68 = vmatpush1.msra.mxu0 %v47
    %69 = vmatprep.subr.mxu0 0.0
    %70 = vmatpush1.msra.mxu0 %v48
    %71 = vmatprep.subr.mxu0 0.0
    %72 = vmatpush1.msra.mxu0 0.0
    %73 = vmatprep.subr.mxu0 0.0
    %74 = vmatpush1.msra.mxu0 0.0
    %75 = vmatprep.subr.mxu0 0.0
    %76 = vmatpush1.msra.mxu0 0.0
    %77 = vmatprep.subr.mxu0 0.0
    %78 = vmatpush1.msra.mxu0 0.0
    %79 = vmatprep.subr.mxu0 0.0
    %80 = vmatpush1.msra.mxu0 0.0
    %81 = vmatprep.subr.mxu0 0.0
    %82 = vmatpush1.msra.mxu0 0.0
    %83 = vmatprep.subr.mxu0 0.0
    %84 = vmatpush1.msra.mxu0 0.0
    %85 = vmatprep.subr.mxu0 0.0
    %86 = vmatpush1.msra.mxu0 0.0
    %87 = vmatprep.subr.mxu0 0.0
    %88 = vmatpush1.msra.mxu0 0.0
    %89 = vmatprep.subr.mxu0 0.0
    %90 = vmatpush1.msra.mxu0 0.0
    %91 = vmatprep.subr.mxu0 0.0
    %92 = vmatpush1.msra.mxu0 0.0
    %93 = vmatprep.subr.mxu0 0.0
    %94 = vmatpush1.msra.mxu0 0.0
    %95 = vmatprep.subr.mxu0 0.0
    %96 = vmatpush1.msra.mxu0 0.0
    %97 = vmatprep.subr.mxu0 0.0
    %98 = vmatpush1.msra.mxu0 0.0
    %99 = vmatprep.subr.mxu0 0.0
    %100 = vmatpush1.msra.mxu0 0.0
    %101 = vmatprep.subr.mxu0 0.0
    %102 = vmatpush1.msra.mxu0 0.0
    %103 = vmatprep.subr.mxu0 0.0
    %104 = vmatpush1.msra.mxu0 0.0
    %105 = vmatprep.subr.mxu0 0.0
    %106 = vmatpush1.msra.mxu0 0.0
    %107 = vmatprep.subr.mxu0 0.0
    %108 = vmatpush1.msra.mxu0 0.0
    %109 = vmatprep.subr.mxu0 0.0
    %110 = vmatpush1.msra.mxu0 0.0
    %111 = vmatprep.subr.mxu0 0.0
    %112 = vmatpush1.msra.mxu0 0.0
    %113 = vmatprep.subr.mxu0 0.0
    %114 = vmatpush1.msra.mxu0 0.0
    %115 = vmatprep.subr.mxu0 0.0
    %116 = vmatpush1.msra.mxu0 0.0
    %117 = vmatprep.subr.mxu0 0.0
    %118 = vmatpush1.msra.mxu0 0.0
    %119 = vmatprep.subr.mxu0 0.0
    %120 = vmatpush1.msra.mxu0 0.0
    %121 = vmatprep.subr.mxu0 0.0
    %122 = vmatpush1.msra.mxu0 0.0
    %123 = vmatprep.subr.mxu0 0.0
    %124 = vmatpush1.msra.mxu0 0.0
    %125 = vmatprep.subr.mxu0 0.0
    %126 = vmatpush1.msra.mxu0 0.0
    %127 = vmatprep.mubr.f32.mxu0 0.0
    %128 = vmatmul.mubr.f32.gmra.mrb[0].mxu0 %v58
    %v129 = vpop.f32.mrb[0].mxu0
    %v130 = vadd.f32 %v54, %v129
    %v131 = vpop.f32.mrb[0].mxu0
    %132 = vmatprep.mubr.f32.mxu0 0.0
    %133 = vmatmul.mubr.f32.gmra.mrb[0].mxu0 %v61
    %v134 = vpop.f32.mrb[0].mxu0
    %v135 = vadd.f32 %v54, %v134
    %v136 = vpop.f32.mrb[0].mxu0
    %137 = vdwg.mxu0
    %138 = vst [vmem:[#allocation7] sm:$0xff] %v130
    %139 = vst [vmem:[#allocation7 + $0x8] sm:$0xff] %v135
    // Predicated region
    $region22: #{tpu_custom_call.1} parent=1 // pred_check
      _
    $region23: #{tpu_custom_call.1} parent=1 // pred_check_branch
      %141 = sbr.rel (0) target = $region25
    $region24: #{tpu_custom_call.1} parent=1 // pred_region
      %s143 = ssub.s32 256, 256
      %144 = vsyncadd [#allocation4], %s143
      %s145 = sshll.u32 [#allocation7], 4
      %s146 = int_to_ptr.vmem [resolvable:$true] %s145
      %151 = dma.vmem_to_hbm [thread:$0]  %s146, 256, %s3, [#allocation4], 128, 128, 8
    $region25: #{tpu_custom_call.1} parent=1 // pred_fallthru
      _
    // Predicated region
    $region26: #{tpu_custom_call.1} parent=1 // pred_check
      _
    $region27: #{tpu_custom_call.1} parent=1 // pred_check_branch
      %153 = sbr.rel (0) target = $region29
    $region28: #{tpu_custom_call.1} parent=1 // pred_region
      %154 = dma.done [#allocation4], 256
    $region29: #{tpu_custom_call.1} parent=1 // pred_fallthru
      _
    %155 = vsyncpa [#allocation3], 1
    %156 = vsyncpa [#allocation6], 1
    %157 = vsyncpa [#allocation4], 1

</llo_original>
